<compile_context>
chip_gen: v7x
topology: tpu7x:2x2x1
jax: 0.10.0
libtpu: 0.0.40
codegen_flags: <defaults>
</compile_context>

<pallas_src>
import jax
import jax.numpy as jnp
from jax.experimental import pallas as pl
from jax.experimental.pallas import tpu as pltpu


def xor_mlp_kernel(params_ref, x_ref, o_ref):
    # params_ref (SMEM, f32[17]) holds the *folded* parameters:
    #   [0:8]   a1 = 0.5*w1, stored (in=2, out=4) row-major: a1[i, j] = params[4*i + j]
    #   [8:12]  c1 = 0.5*b1
    #   [12:16] d  = 0.25*w2
    #   [16]    e  = 0.5*b2 + 0.25*sum(w2)
    # x_ref: (2, TR, C)  -- feature plane, batch on (sublane, lane)
    # o_ref: (TR, C)
    x0 = x_ref[0]                             # (TR, C)
    x1 = x_ref[1]                             # (TR, C)

    acc = None
    for j in range(4):                        # unrolled hidden units: VPU MACs + EUP tanh
        t = jnp.tanh(x0 * params_ref[j] + x1 * params_ref[4 + j] + params_ref[8 + j])
        term = t * params_ref[12 + j]
        acc = term if acc is None else acc + term
    acc = acc + params_ref[16]
    # sigmoid(layer2) == 0.5 + 0.5*tanh(acc) with the folding above (exact).
    o_ref[...] = (0.5 + 0.5 * jnp.tanh(acc)).astype(o_ref.dtype)


def _choose_layout(B):
    """Pick (TR, C) block shape and padded sublane extent R for batch size B."""
    if B <= 8 * 128:
        TR, C = 8, 128            # one minimal dense (8,128) tile
    elif B <= 64 * 1024:
        TR, C = 64, 1024          # 256 KiB out-block per step
    else:
        TR, C = 256, 2048         # 2 MiB out / 4 MiB in per step; ~12 MiB resident
                                  # double-buffered -> fits v7x 64 MiB VMEM easily
    R = pl.cdiv(pl.cdiv(B, C), TR) * TR
    return TR, C, R


def xor_model_forward(x, w1, b1, w2, b2):
    """x: (B, 2) f32; w1: (2, 4); b1: (1, 4) or (4,); w2: (4, 1); b2: (1,1) -> (B, 1) f32."""
    B = x.shape[0]

    w1 = w1.astype(jnp.float32).reshape(2, 4)
    b1 = b1.astype(jnp.float32).reshape(-1)
    w2 = w2.astype(jnp.float32).reshape(-1)
    b2 = jnp.asarray(b2, jnp.float32).reshape(-1)

    # Fold the sigmoid affine constants into the parameters (wrapper-side, once).
    a1 = 0.5 * w1                                   # (2, 4)
    c1 = 0.5 * b1                                   # (4,)
    d = 0.25 * w2                                   # (4,)
    e = 0.5 * b2 + 0.25 * jnp.sum(w2)               # (1,)
    params = jnp.concatenate([a1.reshape(-1), c1, d, e]).astype(jnp.float32)  # (17,)

    TR, C, R = _choose_layout(B)
    Bp = R * C

    # Batch -> dense (sublane, lane) layout: x^T padded and reshaped to (2, R, C).
    # Padded entries are zero and are sliced off after the kernel.
    # TODO(synk): for very large B, produce this planar layout upstream (or
    # deinterleave in-kernel from the row-major (B, 2) buffer) to avoid the
    # extra HBM read/write that this pad+transpose does.
    xt = jnp.pad(x.astype(jnp.float32).T, ((0, 0), (0, Bp - B))).reshape(2, R, C)

    out = pl.pallas_call(
        xor_mlp_kernel,
        out_shape=jax.ShapeDtypeStruct((R, C), jnp.float32),
        grid=(R // TR,),
        in_specs=[
            pl.BlockSpec(memory_space=pltpu.MemorySpace.SMEM),     # packed folded params
            pl.BlockSpec((2, TR, C), lambda i: (0, i, 0)),         # planar x blocks
        ],
        out_specs=pl.BlockSpec((TR, C), lambda i: (i, 0)),
        compiler_params=pltpu.CompilerParams(
            dimension_semantics=("parallel",),                     # v7x: 2 TCs share batch
        ),
    )(params, xt)

    return out.reshape(-1)[:B].reshape(B, 1)


def init_params(key):
    """Deterministic init mimicking nn.Linear's U(-1/sqrt(fan_in), 1/sqrt(fan_in))."""
    k1, k2, k3, k4 = jax.random.split(key, 4)
    bound1 = 1.0 / jnp.sqrt(2.0)   # layer1: fan_in = 2
    bound2 = 1.0 / jnp.sqrt(4.0)   # layer2: fan_in = 4
    # Stored as (in, out) — i.e. the transpose of PyTorch's (out, in) weight.
    w1 = jax.random.uniform(k1, (2, 4), jnp.float32, -bound1, bound1)
    b1 = jax.random.uniform(k2, (1, 4), jnp.float32, -bound1, bound1)
    w2 = jax.random.uniform(k3, (4, 1), jnp.float32, -bound2, bound2)
    b2 = jax.random.uniform(k4, (1, 1), jnp.float32, -bound2, bound2)
    return w1, b1, w2, b2


def reference_forward(x, w1, b1, w2, b2):
    h = jax.nn.sigmoid(x @ w1 + b1)
    return jax.nn.sigmoid(h @ w2 + b2)


if __name__ == "__main__":
    key = jax.random.PRNGKey(0)
    kx, kp = jax.random.split(key)

    B = 8
    # XOR-style inputs (the four {0,1}^2 corners plus a few random points).
    xor_pts = jnp.array([[0.0, 0.0], [0.0, 1.0], [1.0, 0.0], [1.0, 1.0]], jnp.float32)
    rand_pts = jax.random.uniform(kx, (B - 4, 2), jnp.float32)
    x = jnp.concatenate([xor_pts, rand_pts], axis=0)              # (8, 2)

    w1, b1, w2, b2 = init_params(kp)

    out = xor_model_forward(x, w1, b1, w2, b2)
    out = jax.block_until_ready(out)

    ref = reference_forward(x, w1, b1, w2, b2)
    assert out.shape == (B, 1)
    assert jnp.allclose(out, ref, atol=1e-5, rtol=1e-5), "mismatch vs. pure-JAX reference"

    print("KERNEL_OK")
</pallas_src>

<mosaic_0001>
module attributes {stable_mosaic.version = 11 : i64} {
  func.func @xor_mlp_kernel(%arg0: i32, %arg1: memref<17xf32, #tpu.memory_space<smem>>, %arg2: memref<2x8x128xf32, #tpu.memory_space<vmem>>, %arg3: memref<8x128xf32, #tpu.memory_space<vmem>>) attributes {dimension_semantics = [#tpu.dimension_semantics<parallel>], iteration_bounds = array<i64: 1>, scalar_prefetch = 0 : i64, scratch_operands = 0 : i64, tpu.core_type = #tpu.core_type<tc>, window_params = [{transform_indices = @transform_0, window_bounds = array<i64: 17>}, {transform_indices = @transform_1, window_bounds = array<i64: 2, 8, 128>}, {transform_indices = @transform_2, window_bounds = array<i64: 8, 128>}]} {
    %c0 = arith.constant 0 : index
    %c0_0 = arith.constant 0 : index
    %c0_1 = arith.constant 0 : index
    %0 = vector.load %arg2[%c0, %c0_0, %c0_1] : memref<2x8x128xf32, #tpu.memory_space<vmem>>, vector<1x8x128xf32>
    %1 = vector.shape_cast %0 : vector<1x8x128xf32> to vector<8x128xf32>
    %c1 = arith.constant 1 : index
    %c0_2 = arith.constant 0 : index
    %c0_3 = arith.constant 0 : index
    %2 = vector.load %arg2[%c1, %c0_2, %c0_3] : memref<2x8x128xf32, #tpu.memory_space<vmem>>, vector<1x8x128xf32>
    %3 = vector.shape_cast %2 : vector<1x8x128xf32> to vector<8x128xf32>
    %c0_4 = arith.constant 0 : index
    %4 = memref.load %arg1[%c0_4] : memref<17xf32, #tpu.memory_space<smem>>
    %5 = vector.broadcast %4 : f32 to vector<8x128xf32>
    %6 = arith.mulf %1, %5 : vector<8x128xf32>
    %c4 = arith.constant 4 : index
    %7 = memref.load %arg1[%c4] : memref<17xf32, #tpu.memory_space<smem>>
    %8 = vector.broadcast %7 : f32 to vector<8x128xf32>
    %9 = arith.mulf %3, %8 : vector<8x128xf32>
    %10 = arith.addf %6, %9 : vector<8x128xf32>
    %c8 = arith.constant 8 : index
    %11 = memref.load %arg1[%c8] : memref<17xf32, #tpu.memory_space<smem>>
    %12 = vector.broadcast %11 : f32 to vector<8x128xf32>
    %13 = arith.addf %10, %12 : vector<8x128xf32>
    %14 = math.tanh %13 : vector<8x128xf32>
    %c12 = arith.constant 12 : index
    %15 = memref.load %arg1[%c12] : memref<17xf32, #tpu.memory_space<smem>>
    %16 = vector.broadcast %15 : f32 to vector<8x128xf32>
    %17 = arith.mulf %14, %16 : vector<8x128xf32>
    %c1_5 = arith.constant 1 : index
    %18 = memref.load %arg1[%c1_5] : memref<17xf32, #tpu.memory_space<smem>>
    %19 = vector.broadcast %18 : f32 to vector<8x128xf32>
    %20 = arith.mulf %1, %19 : vector<8x128xf32>
    %c5 = arith.constant 5 : index
    %21 = memref.load %arg1[%c5] : memref<17xf32, #tpu.memory_space<smem>>
    %22 = vector.broadcast %21 : f32 to vector<8x128xf32>
    %23 = arith.mulf %3, %22 : vector<8x128xf32>
    %24 = arith.addf %20, %23 : vector<8x128xf32>
    %c9 = arith.constant 9 : index
    %25 = memref.load %arg1[%c9] : memref<17xf32, #tpu.memory_space<smem>>
    %26 = vector.broadcast %25 : f32 to vector<8x128xf32>
    %27 = arith.addf %24, %26 : vector<8x128xf32>
    %28 = math.tanh %27 : vector<8x128xf32>
    %c13 = arith.constant 13 : index
    %29 = memref.load %arg1[%c13] : memref<17xf32, #tpu.memory_space<smem>>
    %30 = vector.broadcast %29 : f32 to vector<8x128xf32>
    %31 = arith.mulf %28, %30 : vector<8x128xf32>
    %32 = arith.addf %17, %31 : vector<8x128xf32>
    %c2 = arith.constant 2 : index
    %33 = memref.load %arg1[%c2] : memref<17xf32, #tpu.memory_space<smem>>
    %34 = vector.broadcast %33 : f32 to vector<8x128xf32>
    %35 = arith.mulf %1, %34 : vector<8x128xf32>
    %c6 = arith.constant 6 : index
    %36 = memref.load %arg1[%c6] : memref<17xf32, #tpu.memory_space<smem>>
    %37 = vector.broadcast %36 : f32 to vector<8x128xf32>
    %38 = arith.mulf %3, %37 : vector<8x128xf32>
    %39 = arith.addf %35, %38 : vector<8x128xf32>
    %c10 = arith.constant 10 : index
    %40 = memref.load %arg1[%c10] : memref<17xf32, #tpu.memory_space<smem>>
    %41 = vector.broadcast %40 : f32 to vector<8x128xf32>
    %42 = arith.addf %39, %41 : vector<8x128xf32>
    %43 = math.tanh %42 : vector<8x128xf32>
    %c14 = arith.constant 14 : index
    %44 = memref.load %arg1[%c14] : memref<17xf32, #tpu.memory_space<smem>>
    %45 = vector.broadcast %44 : f32 to vector<8x128xf32>
    %46 = arith.mulf %43, %45 : vector<8x128xf32>
    %47 = arith.addf %32, %46 : vector<8x128xf32>
    %c3 = arith.constant 3 : index
    %48 = memref.load %arg1[%c3] : memref<17xf32, #tpu.memory_space<smem>>
    %49 = vector.broadcast %48 : f32 to vector<8x128xf32>
    %50 = arith.mulf %1, %49 : vector<8x128xf32>
    %c7 = arith.constant 7 : index
    %51 = memref.load %arg1[%c7] : memref<17xf32, #tpu.memory_space<smem>>
    %52 = vector.broadcast %51 : f32 to vector<8x128xf32>
    %53 = arith.mulf %3, %52 : vector<8x128xf32>
    %54 = arith.addf %50, %53 : vector<8x128xf32>
    %c11 = arith.constant 11 : index
    %55 = memref.load %arg1[%c11] : memref<17xf32, #tpu.memory_space<smem>>
    %56 = vector.broadcast %55 : f32 to vector<8x128xf32>
    %57 = arith.addf %54, %56 : vector<8x128xf32>
    %58 = math.tanh %57 : vector<8x128xf32>
    %c15 = arith.constant 15 : index
    %59 = memref.load %arg1[%c15] : memref<17xf32, #tpu.memory_space<smem>>
    %60 = vector.broadcast %59 : f32 to vector<8x128xf32>
    %61 = arith.mulf %58, %60 : vector<8x128xf32>
    %62 = arith.addf %47, %61 : vector<8x128xf32>
    %c16 = arith.constant 16 : index
    %63 = memref.load %arg1[%c16] : memref<17xf32, #tpu.memory_space<smem>>
    %64 = vector.broadcast %63 : f32 to vector<8x128xf32>
    %65 = arith.addf %62, %64 : vector<8x128xf32>
    %66 = math.tanh %65 : vector<8x128xf32>
    %cst = arith.constant 5.000000e-01 : f32
    %67 = vector.broadcast %cst : f32 to vector<8x128xf32>
    %68 = arith.mulf %67, %66 : vector<8x128xf32>
    %cst_6 = arith.constant 5.000000e-01 : f32
    %69 = vector.broadcast %cst_6 : f32 to vector<8x128xf32>
    %70 = arith.addf %69, %68 : vector<8x128xf32>
    %c0_7 = arith.constant 0 : index
    %c0_8 = arith.constant 0 : index
    %71 = vector.load %arg3[%c0_7, %c0_8] : memref<8x128xf32, #tpu.memory_space<vmem>>, vector<8x128xf32>
    tpu.vector_store %arg3[%c0_7, %c0_8], %70 {strides = array<i32>} : memref<8x128xf32, #tpu.memory_space<vmem>>, vector<8x128xf32>,
    return
  }
  func.func @transform_0(%arg0: i32) -> i32 {
    %c0_i32 = arith.constant 0 : i32
    %c0_i32_0 = arith.constant 0 : i32
    return %c0_i32 : i32
  }
  func.func @transform_1(%arg0: i32) -> (i32, i32, i32) {
    %c0_i32 = arith.constant 0 : i32
    %c0_i32_0 = arith.constant 0 : i32
    %c0_i32_1 = arith.constant 0 : i32
    return %c0_i32, %arg0, %c0_i32_0 : i32, i32, i32
  }
  func.func @transform_2(%arg0: i32) -> (i32, i32) {
    %c0_i32 = arith.constant 0 : i32
    %c0_i32_0 = arith.constant 0 : i32
    return %arg0, %c0_i32 : i32, i32
  }
}

</mosaic_0001>

<llo_original>
// kernel: tpu_custom_call.1
$region0: #{tpu_custom_call.1}
  #allocation0 [shape = 'u32[]', space=smem, size = 0x4, offset = 0x4, fixed_abs, tag = 'smem constant byte address 0x4 - core index']
  #allocation1 [shape = 'u32[144,128]{1,0:T(1,128)}', space=vmem, size = 0x12000, scoped, tag = 'internal scratch']
  %s0 = inlined_call_operand.hbm [shape: f32[17], index: 0, kind: input, shape index: {}]
  %s1 = inlined_call_operand.hbm [shape: f32[2,8,128], index: 1, kind: input, shape index: {}]
  %s2 = inlined_call_operand.hbm [shape: f32[8,128], index: 2, kind: output, shape index: {}]
  %s3 = sld [smem:[#allocation0]]
  $region26: #{tpu_custom_call.1} parent=0
    _
  %s5 = ssub.s32 1, %s3
  %s6 = scalar_select 0, %s5, %s3
  $region1: #{tpu_custom_call.1} parent=0
    #allocation2 [shape = 'u8[512]{0}', space=smem, size = 0x200, scoped, tag = 'input window, operand 0, single buffered']
    #allocation3 [shape = 's32[1]{0}', space=sflag, size = 0x4, scoped, tag = 'scoped memory for tpu_custom_call.1']
    #allocation4 [shape = 's32[1]{0}', space=sflag, size = 0x4, scoped, tag = 'scoped memory for tpu_custom_call.1']
    #allocation5 [shape = 's32[1]{0}', space=sflag, size = 0x4, scoped, tag = 'scoped memory for tpu_custom_call.1']
    #allocation6 [shape = 'u8[8192]{0}', space=vmem, size = 0x2000, scoped, tag = 'input window, operand 1, single buffered']
    #allocation7 [shape = 'u8[4096]{0}', space=vmem, size = 0x1000, scoped, tag = 'output window, operand 0, single buffered']
    %7 = vsyncpa [#allocation5], 0
    %8 = vsyncpa [#allocation3], 0
    %9 = vsyncpa [#allocation4], 0
    // Predicated region
    $region2: #{tpu_custom_call.1} parent=1 // pred_check
      _
    $region3: #{tpu_custom_call.1} parent=1 // pred_check_branch
      %11 = sbr.rel (0) target = $region5
    $region4: #{tpu_custom_call.1} parent=1 // pred_region
      %s13 = ssub.s32 16, 16
      %14 = vsyncadd [#allocation5], %s13
      %17 = dma.hbm_to_smem %s0, 16, [#allocation2], [#allocation5]
    $region5: #{tpu_custom_call.1} parent=1 // pred_fallthru
      _
    // Predicated region
    $region6: #{tpu_custom_call.1} parent=1 // pred_check
      _
    $region7: #{tpu_custom_call.1} parent=1 // pred_check_branch
      %19 = sbr.rel (0) target = $region9
    $region8: #{tpu_custom_call.1} parent=1 // pred_region
      %s21 = ssub.s32 256, 256
      %22 = vsyncadd [#allocation3], %s21
      %s23 = sshll.u32 [#allocation6], 4
      %s24 = int_to_ptr.vmem [resolvable:$true] %s23
      %29 = dma.hbm_to_vmem [thread:$0]  %s1, 256, %s24, [#allocation3], 128, 128, 8
    $region9: #{tpu_custom_call.1} parent=1 // pred_fallthru
      _
    // Predicated region
    $region10: #{tpu_custom_call.1} parent=1 // pred_check
      _
    $region11: #{tpu_custom_call.1} parent=1 // pred_check_branch
      %31 = sbr.rel (0) target = $region13
    $region12: #{tpu_custom_call.1} parent=1 // pred_region
      %32 = dma.done [#allocation5], 16
    $region13: #{tpu_custom_call.1} parent=1 // pred_fallthru
      _
    // Predicated region
    $region14: #{tpu_custom_call.1} parent=1 // pred_check
      _
    $region15: #{tpu_custom_call.1} parent=1 // pred_check_branch
      %34 = sbr.rel (0) target = $region17
    $region16: #{tpu_custom_call.1} parent=1 // pred_region
      %35 = dma.done [#allocation3], 256
    $region17: #{tpu_custom_call.1} parent=1 // pred_fallthru
      _
    %36 = sfence
    %v37 = vld [vmem:[#allocation6] sm:$0xff]
    %s38 = scalar_lea.vmem [#allocation6], 8
    %v39 = vld [vmem:[%s38] sm:$0xff]
    %s40 = sld [smem:[#allocation2]]
    %v41 = vstv %s40
    %v42 = vmul.f32 %v37, %v41
    %s43 = sld [smem:[#allocation2 + $0x4]]
    %v44 = vstv %s43
    %v45 = vmul.f32 %v39, %v44
    %v46 = vadd.f32 %v42, %v45
    %s47 = sld [smem:[#allocation2 + $0x8]]
    %v48 = vstv %s47
    %v49 = vadd.f32 %v46, %v48
    %v50 = vtanh.pop %v49
    %s51 = sld [smem:[#allocation2 + $0xc]]
    %v52 = vstv %s51
    %v53 = vmul.f32 %v50, %v52
    %s54 = sld [smem:[#allocation2 + $0x1]]
    %v55 = vstv %s54
    %v56 = vmul.f32 %v37, %v55
    %s57 = sld [smem:[#allocation2 + $0x5]]
    %v58 = vstv %s57
    %v59 = vmul.f32 %v39, %v58
    %v60 = vadd.f32 %v56, %v59
    %s61 = sld [smem:[#allocation2 + $0x9]]
    %v62 = vstv %s61
    %v63 = vadd.f32 %v60, %v62
    %v64 = vtanh.pop %v63
    %s65 = sld [smem:[#allocation2 + $0xd]]
    %v66 = vstv %s65
    %v67 = vmul.f32 %v64, %v66
    %v68 = vadd.f32 %v53, %v67
    %s69 = sld [smem:[#allocation2 + $0x2]]
    %v70 = vstv %s69
    %v71 = vmul.f32 %v37, %v70
    %s72 = sld [smem:[#allocation2 + $0x6]]
    %v73 = vstv %s72
    %v74 = vmul.f32 %v39, %v73
    %v75 = vadd.f32 %v71, %v74
    %s76 = sld [smem:[#allocation2 + $0xa]]
    %v77 = vstv %s76
    %v78 = vadd.f32 %v75, %v77
    %v79 = vtanh.pop %v78
    %s80 = sld [smem:[#allocation2 + $0xe]]
    %v81 = vstv %s80
    %v82 = vmul.f32 %v79, %v81
    %v83 = vadd.f32 %v68, %v82
    %s84 = sld [smem:[#allocation2 + $0x3]]
    %v85 = vstv %s84
    %v86 = vmul.f32 %v37, %v85
    %s87 = sld [smem:[#allocation2 + $0x7]]
    %v88 = vstv %s87
    %v89 = vmul.f32 %v39, %v88
    %v90 = vadd.f32 %v86, %v89
    %s91 = sld [smem:[#allocation2 + $0xb]]
    %v92 = vstv %s91
    %v93 = vadd.f32 %v90, %v92
    %v94 = vtanh.pop %v93
    %s95 = sld [smem:[#allocation2 + $0xf]]
    %v96 = vstv %s95
    %v97 = vmul.f32 %v94, %v96
    %v98 = vadd.f32 %v83, %v97
    %s99 = sld [smem:[#allocation2 + $0x10]]
    %v100 = vstv %s99
    %v101 = vadd.f32 %v98, %v100
    %v102 = vtanh.pop %v101
    %v103 = vmul.f32 %v102, 0.5
    %v104 = vadd.f32 %v103, 0.5
    %105 = vst [vmem:[#allocation7] sm:$0xff] %v104
    // Predicated region
    $region18: #{tpu_custom_call.1} parent=1 // pred_check
      _
    $region19: #{tpu_custom_call.1} parent=1 // pred_check_branch
      %107 = sbr.rel (0) target = $region21
    $region20: #{tpu_custom_call.1} parent=1 // pred_region
      %s109 = ssub.s32 128, 128
      %110 = vsyncadd [#allocation4], %s109
      %s112 = sshll.u32 [#allocation7], 4
      %s113 = int_to_ptr.vmem [resolvable:$true] %s112
      %115 = dma.vmem_to_hbm [thread:$0]  %s113, 128, %s2, [#allocation4]
    $region21: #{tpu_custom_call.1} parent=1 // pred_fallthru
      _
    // Predicated region
    $region22: #{tpu_custom_call.1} parent=1 // pred_check
      _
    $region23: #{tpu_custom_call.1} parent=1 // pred_check_branch
      %117 = sbr.rel (0) target = $region25
    $region24: #{tpu_custom_call.1} parent=1 // pred_region
      %118 = dma.done [#allocation4], 128
    $region25: #{tpu_custom_call.1} parent=1 // pred_fallthru
      _
    %119 = vsyncpa [#allocation3], 1
    %120 = vsyncpa [#allocation4], 1
    %121 = vsyncpa [#allocation5], 1

</llo_original>
